<compile_context>
chip_gen: v6e
topology: v6e:2x2x1
jax: 0.10.0
libtpu: 0.0.40
codegen_flags: <defaults>
</compile_context>

<pallas_src>
import functools
import math

import jax
import jax.numpy as jnp
from jax.experimental import pallas as pl
from jax.experimental.pallas import tpu as pltpu

_LOG_1E4 = math.log(1e-4)  # log of the one-hot clamp floor used by RCE


def _round_up(x, m):
    return ((x + m - 1) // m) * m


def _nce_rce_kernel(pred_ref, lab_ref, out_ref, *, num_classes, n_valid,
                    tile_b, a_scale, b_scale):
    i = pl.program_id(0)

    x = pred_ref[...].astype(jnp.float32)            # (TB, C) logits
    labels = lab_ref[...]                            # (TB, 1) int32

    # Rows past the real batch (ragged last grid block) hold whatever was in HBM.
    # Zero them BEFORE exp so no inf/NaN can leak through the final masking.
    row_ids = i * tile_b + jax.lax.broadcasted_iota(jnp.int32, (tile_b, 1), 0)
    row_valid = row_ids < n_valid                    # (TB, 1) bool
    x = jnp.where(row_valid, x, 0.0)

    col_ids = jax.lax.broadcasted_iota(jnp.int32, x.shape, 1)
    is_label = col_ids == labels                     # (TB, C) bool

    # --- shared softmax statistics ---
    m = jnp.max(x, axis=1, keepdims=True)            # (TB, 1)
    z = x - m
    ez = jnp.exp(z)
    sum_ez = jnp.sum(ez, axis=1, keepdims=True)      # (TB, 1)
    log_sum_ez = jnp.log(sum_ez)
    inv_sum_ez = 1.0 / sum_ez                        # exact: only (TB,1) elements

    # --- NormalizedCrossEntropy: sum(onehot*logp)/sum(logp), logp never materialized
    #     sum(onehot*logp) = z[label] - log_sum_ez
    #     sum(logp)        = sum(z) - C*log_sum_ez
    num = jnp.sum(jnp.where(is_label, z, 0.0), axis=1, keepdims=True) - log_sum_ez
    den = jnp.sum(z, axis=1, keepdims=True) - jnp.float32(num_classes) * log_sum_ez
    nce_i = num / den                                # (TB, 1)

    # --- ReverseCrossEntropy: -sum(clamp(p,1e-7,1) * log(clamp(onehot,1e-4,1)))
    #     log term is 0 at the label column, log(1e-4) elsewhere.
    p_c = jnp.maximum(ez * inv_sum_ez, jnp.float32(1e-7))   # p <= 1 by construction
    rce_i = jnp.float32(-_LOG_1E4) * jnp.sum(
        jnp.where(is_label, 0.0, p_c), axis=1, keepdims=True)

    row_mask = row_valid.astype(jnp.float32)
    partial = (jnp.float32(a_scale) * jnp.sum(nce_i * row_mask)
               + jnp.float32(b_scale) * jnp.sum(rce_i * row_mask))

    # Lane-dense (1, 8, 128) store; the wrapper reads element [i, 0, 0] per tile.
    out_ref[...] = jnp.zeros_like(out_ref) + partial


def _vmem_capacity_bytes():
    try:
        return int(pltpu.get_tpu_info().vmem_capacity_bytes)
    except Exception:
        return 64 * 1024 * 1024  # conservative (v7x-sized) fallback


def nce_and_rce(pred, labels, *, alpha=1.0, beta=1.0, tile_b=None):
    """NCE + RCE loss.  pred: (N, C) float logits (f32 or bf16 -- keep bf16 inputs
    as bf16, the kernel upcasts in-register); labels: (N,) ints.  Returns f32 scalar."""
    n, c = pred.shape
    in_bytes = jnp.dtype(pred.dtype).itemsize
    c_lanes = _round_up(c, 128)          # vregs are lane-padded; size temps off this
    vmem_cap = _vmem_capacity_bytes()

    if tile_b is None:
        # Tiling budget: generous on 128 MiB parts (v5e/v6e), tighter on 64 MiB (v7x).
        budget = int(vmem_cap * (0.45 if vmem_cap >= (96 << 20) else 0.40))
        # Double-buffered input tile + ~40 B/elem of f32 temporaries (z, ez, p, masks).
        per_row = c_lanes * (2 * in_bytes + 40)
        max_rows = max(8, budget // per_row)
        tile_b = 1024
        while tile_b > max_rows:
            tile_b //= 2
        # Keep the grid length >= 2 so both v7x TensorCores get work.
        tile_b = min(tile_b, _round_up(pl.cdiv(n, 2), 8))
    tile_b = max(8, _round_up(int(tile_b), 8))

    num_tiles = pl.cdiv(n, tile_b)
    labels2d = labels.astype(jnp.int32).reshape(n, 1)

    est = tile_b * c_lanes * (2 * in_bytes + 40) + (2 << 20)
    vmem_limit = int(min(int(vmem_cap * 0.8), max(32 << 20, int(1.5 * est))))

    kernel = functools.partial(
        _nce_rce_kernel,
        num_classes=int(c),
        n_valid=int(n),
        tile_b=int(tile_b),
        a_scale=float(alpha) / float(n),
        b_scale=float(beta) / float(n),
    )

    out = pl.pallas_call(
        kernel,
        out_shape=jax.ShapeDtypeStruct((num_tiles, 8, 128), jnp.float32),
        grid_spec=pltpu.PrefetchScalarGridSpec(
            num_scalar_prefetch=0,
            grid=(num_tiles,),
            in_specs=[
                # Full-extent class axis: no host-side padding, Mosaic masks lanes.
                pl.BlockSpec((tile_b, c), lambda i: (i, 0)),
                pl.BlockSpec((tile_b, 1), lambda i: (i, 0)),
            ],
            out_specs=pl.BlockSpec((1, 8, 128), lambda i: (i, 0, 0)),
        ),
        compiler_params=pltpu.CompilerParams(
            dimension_semantics=("parallel",),
            vmem_limit_bytes=vmem_limit,
        ),
    )(pred, labels2d)

    # one meaningful element per tile; tiny host-side reduction
    return jnp.sum(out[:, 0, 0])


def _reference(pred, labels, alpha, beta, num_classes):
    # plain-JAX reference mirroring the PyTorch module
    logp = jax.nn.log_softmax(pred.astype(jnp.float32), axis=1)
    oh = jax.nn.one_hot(labels, num_classes, dtype=jnp.float32)
    nce = -jnp.sum(oh * logp, axis=1) / -jnp.sum(logp, axis=1)
    p = jnp.clip(jax.nn.softmax(pred.astype(jnp.float32), axis=1), 1e-7, 1.0)
    oh_c = jnp.clip(oh, 1e-4, 1.0)
    rce = -jnp.sum(p * jnp.log(oh_c), axis=1)
    return alpha * nce.mean() + beta * rce.mean()


if __name__ == "__main__":
    key = jax.random.PRNGKey(0)
    k1, k2, k3, k4 = jax.random.split(key, 4)

    # Case 1: small "nice" shapes; auto tile_b path (grid of 2 for v7x dual-TC).
    N, C = 32, 10
    pred = jax.random.normal(k1, (N, C), dtype=jnp.float32) * 3.0
    labels = jax.random.randint(k2, (N,), 0, C, dtype=jnp.int32)
    loss = jax.block_until_ready(nce_and_rce(pred, labels, alpha=1.0, beta=1.0))
    ref = _reference(pred, labels, 1.0, 1.0, C)
    assert jnp.allclose(loss, ref, rtol=1e-3, atol=1e-3), (loss, ref)

    # Case 2: non-divisible batch -> ragged last grid block exercises the row masking.
    N2, C2 = 300, 10
    pred2 = jax.random.normal(k3, (N2, C2), dtype=jnp.float32) * 2.0
    labels2 = jax.random.randint(k4, (N2,), 0, C2, dtype=jnp.int32)
    loss2 = jax.block_until_ready(
        nce_and_rce(pred2, labels2, alpha=0.5, beta=2.0, tile_b=128))
    ref2 = _reference(pred2, labels2, 0.5, 2.0, C2)
    assert jnp.allclose(loss2, ref2, rtol=1e-3, atol=1e-3), (loss2, ref2)

    print("KERNEL_OK")
</pallas_src>

<mosaic_0001>
module attributes {stable_mosaic.version = 11 : i64} {
  func.func @_nce_rce_kernel(%arg0: i32, %arg1: memref<16x10xf32, #tpu.memory_space<vmem>>, %arg2: memref<16x1xi32, #tpu.memory_space<vmem>>, %arg3: memref<1x8x128xf32, #tpu.memory_space<vmem>>) attributes {dimension_semantics = [#tpu.dimension_semantics<parallel>], iteration_bounds = array<i64: 2>, scalar_prefetch = 0 : i64, scratch_operands = 0 : i64, tpu.core_type = #tpu.core_type<tc>, window_params = [{transform_indices = @transform_0, window_bounds = array<i64: 16, 10>}, {transform_indices = @transform_1, window_bounds = array<i64: 16, 1>}, {transform_indices = @transform_2, window_bounds = array<i64: 1, 8, 128>}]} {
    %c0 = arith.constant 0 : index
    %c0_0 = arith.constant 0 : index
    %0 = vector.load %arg1[%c0, %c0_0] : memref<16x10xf32, #tpu.memory_space<vmem>>, vector<16x10xf32>
    %c0_1 = arith.constant 0 : index
    %c0_2 = arith.constant 0 : index
    %1 = vector.load %arg2[%c0_1, %c0_2] : memref<16x1xi32, #tpu.memory_space<vmem>>, vector<16x1xi32>
    %c16_i32 = arith.constant 16 : i32
    %2 = arith.muli %arg0, %c16_i32 : i32
    %3 = tpu.iota {dimensions = array<i32: 0>} : vector<16x1xi32>
    %4 = vector.broadcast %2 : i32 to vector<16x1xi32>
    %5 = arith.addi %4, %3 : vector<16x1xi32>
    %c32_i32 = arith.constant 32 : i32
    %6 = vector.broadcast %c32_i32 : i32 to vector<16x1xi32>
    %7 = arith.cmpi slt, %5, %6 : vector<16x1xi32>
    %cst = arith.constant 0.000000e+00 : f32
    %8 = vector.shape_cast %7 : vector<16x1xi1> to vector<16x1xi1>
    %9 = vector.broadcast %8 : vector<16x1xi1> to vector<16x10xi1>
    %10 = vector.broadcast %cst : f32 to vector<16x10xf32>
    %11 = arith.select %9, %0, %10 : vector<16x10xi1>, vector<16x10xf32>
    %12 = tpu.iota {dimensions = array<i32: 1>} : vector<16x10xi32>
    %13 = vector.broadcast %1 : vector<16x1xi32> to vector<16x10xi32>
    %14 = arith.cmpi eq, %12, %13 : vector<16x10xi32>
    %cst_3 = arith.constant dense<0xFF800000> : vector<16xf32>
    %15 = vector.multi_reduction <maximumf>, %11, %cst_3 [1] : vector<16x10xf32> to vector<16xf32>
    %16 = vector.shape_cast %15 : vector<16xf32> to vector<16x1xf32>
    %17 = vector.broadcast %16 : vector<16x1xf32> to vector<16x10xf32>
    %18 = arith.subf %11, %17 : vector<16x10xf32>
    %19 = math.exp %18 : vector<16x10xf32>
    %cst_4 = arith.constant dense<0.000000e+00> : vector<16xf32>
    %20 = vector.multi_reduction <add>, %19, %cst_4 [1] : vector<16x10xf32> to vector<16xf32>
    %21 = vector.shape_cast %20 : vector<16xf32> to vector<16x1xf32>
    %22 = math.log %21 : vector<16x1xf32>
    %cst_5 = arith.constant 1.000000e+00 : f32
    %23 = vector.broadcast %cst_5 : f32 to vector<16x1xf32>
    %24 = arith.divf %23, %21 : vector<16x1xf32>
    %cst_6 = arith.constant 0.000000e+00 : f32
    %25 = vector.broadcast %cst_6 : f32 to vector<16x10xf32>
    %26 = arith.select %14, %18, %25 : vector<16x10xi1>, vector<16x10xf32>
    %cst_7 = arith.constant dense<0.000000e+00> : vector<16xf32>
    %27 = vector.multi_reduction <add>, %26, %cst_7 [1] : vector<16x10xf32> to vector<16xf32>
    %28 = vector.shape_cast %27 : vector<16xf32> to vector<16x1xf32>
    %29 = arith.subf %28, %22 : vector<16x1xf32>
    %cst_8 = arith.constant dense<0.000000e+00> : vector<16xf32>
    %30 = vector.multi_reduction <add>, %18, %cst_8 [1] : vector<16x10xf32> to vector<16xf32>
    %31 = vector.shape_cast %30 : vector<16xf32> to vector<16x1xf32>
    %cst_9 = arith.constant 1.000000e+01 : f32
    %32 = vector.broadcast %cst_9 : f32 to vector<16x1xf32>
    %33 = arith.mulf %32, %22 : vector<16x1xf32>
    %34 = arith.subf %31, %33 : vector<16x1xf32>
    %35 = arith.divf %29, %34 : vector<16x1xf32>
    %36 = vector.broadcast %24 : vector<16x1xf32> to vector<16x10xf32>
    %37 = arith.mulf %19, %36 : vector<16x10xf32>
    %cst_10 = arith.constant 1.000000e-07 : f32
    %38 = vector.broadcast %cst_10 : f32 to vector<16x10xf32>
    %39 = arith.maximumf %37, %38 : vector<16x10xf32>
    %cst_11 = arith.constant 0.000000e+00 : f32
    %40 = vector.broadcast %cst_11 : f32 to vector<16x10xf32>
    %41 = arith.select %14, %40, %39 : vector<16x10xi1>, vector<16x10xf32>
    %cst_12 = arith.constant dense<0.000000e+00> : vector<16xf32>
    %42 = vector.multi_reduction <add>, %41, %cst_12 [1] : vector<16x10xf32> to vector<16xf32>
    %43 = vector.shape_cast %42 : vector<16xf32> to vector<16x1xf32>
    %cst_13 = arith.constant 9.21034049 : f32
    %44 = vector.broadcast %cst_13 : f32 to vector<16x1xf32>
    %45 = arith.mulf %44, %43 : vector<16x1xf32>
    %46 = arith.extui %7 : vector<16x1xi1> to vector<16x1xi32>
    %47 = arith.sitofp %46 : vector<16x1xi32> to vector<16x1xf32>
    %48 = arith.mulf %35, %47 : vector<16x1xf32>
    %49 = vector.shape_cast %48 : vector<16x1xf32> to vector<1x16x1xf32>
    %cst_14 = arith.constant dense<0.000000e+00> : vector<1xf32>
    %50 = vector.multi_reduction <add>, %49, %cst_14 [1, 2] : vector<1x16x1xf32> to vector<1xf32>
    %51 = vector.shape_cast %50 : vector<1xf32> to vector<1x1x1xf32>
    %52 = vector.extract %51[0, 0, 0] : f32 from vector<1x1x1xf32>
    %cst_15 = arith.constant 3.125000e-02 : f32
    %53 = arith.mulf %cst_15, %52 : f32
    %54 = arith.mulf %45, %47 : vector<16x1xf32>
    %55 = vector.shape_cast %54 : vector<16x1xf32> to vector<1x16x1xf32>
    %cst_16 = arith.constant dense<0.000000e+00> : vector<1xf32>
    %56 = vector.multi_reduction <add>, %55, %cst_16 [1, 2] : vector<1x16x1xf32> to vector<1xf32>
    %57 = vector.shape_cast %56 : vector<1xf32> to vector<1x1x1xf32>
    %58 = vector.extract %57[0, 0, 0] : f32 from vector<1x1x1xf32>
    %cst_17 = arith.constant 3.125000e-02 : f32
    %59 = arith.mulf %cst_17, %58 : f32
    %60 = arith.addf %53, %59 : f32
    %cst_18 = arith.constant 0.000000e+00 : f32
    %61 = vector.broadcast %cst_18 : f32 to vector<1x8x128xf32>
    %62 = vector.broadcast %60 : f32 to vector<1x8x128xf32>
    %63 = arith.addf %61, %62 : vector<1x8x128xf32>
    %c0_19 = arith.constant 0 : index
    %c0_20 = arith.constant 0 : index
    %c0_21 = arith.constant 0 : index
    %64 = vector.load %arg3[%c0_19, %c0_20, %c0_21] : memref<1x8x128xf32, #tpu.memory_space<vmem>>, vector<1x8x128xf32>
    tpu.vector_store %arg3[%c0_19, %c0_20, %c0_21], %63 {strides = array<i32>} : memref<1x8x128xf32, #tpu.memory_space<vmem>>, vector<1x8x128xf32>,
    return
  }
  func.func @transform_0(%arg0: i32) -> (i32, i32) {
    %c0_i32 = arith.constant 0 : i32
    %c0_i32_0 = arith.constant 0 : i32
    return %arg0, %c0_i32 : i32, i32
  }
  func.func @transform_1(%arg0: i32) -> (i32, i32) {
    %c0_i32 = arith.constant 0 : i32
    %c0_i32_0 = arith.constant 0 : i32
    return %arg0, %c0_i32 : i32, i32
  }
  func.func @transform_2(%arg0: i32) -> (i32, i32, i32) {
    %c0_i32 = arith.constant 0 : i32
    %c0_i32_0 = arith.constant 0 : i32
    %c0_i32_1 = arith.constant 0 : i32
    return %arg0, %c0_i32, %c0_i32_0 : i32, i32, i32
  }
}

</mosaic_0001>

<llo_original>
// kernel: tpu_custom_call.1
$region0: #{tpu_custom_call.1}
  #allocation0 [shape = 'u32[]', space=smem, size = 0x4, offset = 0x4, fixed_abs, tag = 'smem constant byte address 0x4 - core index']
  #allocation1 [shape = 'u32[144,128]{1,0:T(1,128)}', space=vmem, size = 0x12000, scoped, tag = 'internal scratch']
  %s0 = inlined_call_operand.vmem [shape: f32[32,10], index: 0, kind: input, shape index: {}]
  %s1 = inlined_call_operand.vmem [shape: s32[32,1], index: 1, kind: input, shape index: {}]
  %s2 = inlined_call_operand.hbm [shape: f32[2,8,128], index: 2, kind: output, shape index: {}]
  %s3 = sld [smem:[#allocation0]]
  $region41: #{tpu_custom_call.1} parent=0
    _
  %s5 = ssub.s32 1, %s3
  %s6 = scalar_select 0, %s5, %s3
  $region1: #{tpu_custom_call.1} parent=0
    #allocation2 [shape = 'u8[8192]{0}', space=vmem, size = 0x2000, scoped, tag = 'output window, operand 0']
    #allocation3 [shape = 's32[2]{0}', space=sflag, size = 0x8, scoped, tag = 'scoped memory for tpu_custom_call.1']
    %7 = vsyncpa [#allocation3], 0
    %s8 = scalar_lea.sflag [#allocation3], 1
    %9 = vsyncpa %s8, 0
    loop: start=0, step=1, limit=4
    $region2: #{tpu_custom_call.1} parent=1 // loop_pre_header
      _
    $region3: #{tpu_custom_call.1} parent=1 // loop_header
      %s11 = sphi 0, %s15
      %p12 = scmp.ge.s32.totalorder %s11, 4
      %s21 = sphi 0, %s23
      %s24 = sphi 0, %s21
      %s25 = sphi 0, %s24
      %s41 = sphi 0, %s25
      %s47 = sphi 0, %s49
      %s50 = sphi 0, %s47
      %s51 = sphi 0, %s50
      %s67 = sphi 0, %s51
      %s73 = sphi 0, %s75
      %s76 = sphi 0, %s73
      %s77 = sphi 0, %s76
      %s93 = sphi 0, %s77
    $region4: #{tpu_custom_call.1} parent=1 // loop_header_branch
      %14 = sbr.rel (%p12) target = $region8
    $region5: #{tpu_custom_call.1} parent=1 // loop_body
      %s16 = ssub.s32 %s11, 1
      %s17 = ssub.s32 %s11, 2
      %s18 = sadd.s32 %s11, 1
      %s19 = ssub.s32 %s11, %s18
      %p20 = scmp.eq.s32.totalorder %s19, 0
      %s22 = sadd.s32 %s21, 1
      %s23 = scalar_select %p20, %s21, %s22
      %p26 = pneg %p20
      %p27 = scmp.eq.s32.totalorder %s11, 1
      %p28 = por %p26, %p27
      %p29 = scmp.ne.s32.totalorder %s21, %s24
      %p30 = scmp.eq.s32.totalorder %s11, 0
      %p31 = por %p29, %p30
      %p32 = scmp.ne.s32.totalorder %s21, %s24
      %p33 = scmp.eq.s32.totalorder %s16, 1
      %p34 = por %p32, %p33
      %p35 = scmp.ne.s32.totalorder %s24, %s25
      %p36 = scmp.eq.s32.totalorder %s16, 0
      %p37 = por %p35, %p36
      %p38 = scmp.ne.s32.totalorder %s24, %s25
      %p39 = scmp.eq.s32.totalorder %s17, 1
      %p40 = por %p38, %p39
      %p42 = scmp.ne.s32.totalorder %s25, %s41
      %p43 = scmp.eq.s32.totalorder %s17, 0
      %p44 = por %p42, %p43
      %s45 = ssub.s32 %s11, %s18
      %p46 = scmp.eq.s32.totalorder %s45, 0
      %s48 = sadd.s32 %s47, 1
      %s49 = scalar_select %p46, %s47, %s48
      %p52 = pneg %p46
      %p53 = scmp.eq.s32.totalorder %s11, 1
      %p54 = por %p52, %p53
      %p55 = scmp.ne.s32.totalorder %s47, %s50
      %p56 = scmp.eq.s32.totalorder %s11, 0
      %p57 = por %p55, %p56
      %p58 = scmp.ne.s32.totalorder %s47, %s50
      %p59 = scmp.eq.s32.totalorder %s16, 1
      %p60 = por %p58, %p59
      %p61 = scmp.ne.s32.totalorder %s50, %s51
      %p62 = scmp.eq.s32.totalorder %s16, 0
      %p63 = por %p61, %p62
      %p64 = scmp.ne.s32.totalorder %s50, %s51
      %p65 = scmp.eq.s32.totalorder %s17, 1
      %p66 = por %p64, %p65
      %p68 = scmp.ne.s32.totalorder %s51, %s67
      %p69 = scmp.eq.s32.totalorder %s17, 0
      %p70 = por %p68, %p69
      %s71 = ssub.s32 %s11, %s18
      %p72 = scmp.eq.s32.totalorder %s71, 0
      %s74 = sadd.s32 %s73, 1
      %s75 = scalar_select %p72, %s73, %s74
      %p78 = pneg %p72
      %p79 = scmp.eq.s32.totalorder %s11, 1
      %p80 = por %p78, %p79
      %p81 = scmp.ne.s32.totalorder %s73, %s76
      %p82 = scmp.eq.s32.totalorder %s11, 0
      %p83 = por %p81, %p82
      %p84 = scmp.ne.s32.totalorder %s73, %s76
      %p85 = scmp.eq.s32.totalorder %s16, 1
      %p86 = por %p84, %p85
      %p87 = scmp.ne.s32.totalorder %s76, %s77
      %p88 = scmp.eq.s32.totalorder %s16, 0
      %p89 = por %p87, %p88
      %p90 = scmp.ne.s32.totalorder %s76, %s77
      %p91 = scmp.eq.s32.totalorder %s17, 1
      %p92 = por %p90, %p91
      %p94 = scmp.ne.s32.totalorder %s77, %s93
      %p95 = scmp.eq.s32.totalorder %s17, 0
      %p96 = por %p94, %p95
      %p97 = scmp.le.s32.totalorder 1, %s11
      %p98 = scmp.lt.s32.totalorder %s11, 3
      %p99 = pnand %p97, %p98
      %p100 = pneg %p99
      // Predicated region
      $region9: #{tpu_custom_call.1} parent=5 // pred_check
        _
      $region10: #{tpu_custom_call.1} parent=5 // pred_check_branch
        %102 = sbr.rel (%p99) target = $region12
      $region11: #{tpu_custom_call.1} parent=5 // pred_region
        %s103 = ssub.s32 %s11, 1
      $region12: #{tpu_custom_call.1} parent=5 // pred_fallthru
        _
      %p104 = scmp.lt.s32.totalorder %s11, 2
      // Predicated region
      $region13: #{tpu_custom_call.1} parent=5 // pred_check
        %p105 = pneg %p104
      $region14: #{tpu_custom_call.1} parent=5 // pred_check_branch
        %107 = sbr.rel (%p105) target = $region16
      $region15: #{tpu_custom_call.1} parent=5 // pred_region
        // Predicated region
        $region17: #{tpu_custom_call.1} parent=15 // pred_check
          %p108 = pneg %p31
        $region18: #{tpu_custom_call.1} parent=15 // pred_check_branch
          %110 = sbr.rel (%p108) target = $region20
        $region19: #{tpu_custom_call.1} parent=15 // pred_region
          %s111 = smul.u32 2, %s11
          %p112 = scmp.lt.s32.totalorder %s111, 3
          %s113 = scalar_select %p112, %s111, 3
          %s114 = smul.addr %s113, 8
          %s115 = scalar_lea.vmem %s0, %s114
          %s116 = smul.u32 2, %s11
        $region20: #{tpu_custom_call.1} parent=15 // pred_fallthru
          _
        // Predicated region
        $region21: #{tpu_custom_call.1} parent=15 // pred_check
          %p117 = pneg %p57
        $region22: #{tpu_custom_call.1} parent=15 // pred_check_branch
          %119 = sbr.rel (%p117) target = $region24
        $region23: #{tpu_custom_call.1} parent=15 // pred_region
          %s120 = smul.u32 2, %s11
          %p121 = scmp.lt.s32.totalorder %s120, 3
          %s122 = scalar_select %p121, %s120, 3
          %s123 = smul.addr %s122, 8
          %s124 = scalar_lea.vmem %s1, %s123
          %s125 = smul.u32 2, %s11
        $region24: #{tpu_custom_call.1} parent=15 // pred_fallthru
          _
      $region16: #{tpu_custom_call.1} parent=5 // pred_fallthru
        _
      %p126 = scmp.le.s32.totalorder 1, %s11
      %p127 = scmp.lt.s32.totalorder %s11, 3
      %p128 = pnand %p126, %p127
      %p129 = pneg %p128
      // Predicated region
      $region25: #{tpu_custom_call.1} parent=5 // pred_check
        _
      $region26: #{tpu_custom_call.1} parent=5 // pred_check_branch
        %131 = sbr.rel (%p128) target = $region28
      $region27: #{tpu_custom_call.1} parent=5 // pred_region
        %s132 = ssub.s32 %s11, 1
        %s133 = smul.u32 2, %s16
        %p134 = scmp.lt.s32.totalorder %s133, 3
        %s135 = scalar_select %p134, %s133, 3
        %s136 = smul.addr %s135, 8
        %s137 = scalar_lea.vmem %s0, %s136
        %p138 = pneg %p37
        %p139 = pneg %p34
        %s140 = smul.u32 2, %s16
        %p141 = scmp.lt.s32.totalorder %s140, 3
        %s142 = scalar_select %p141, %s140, 3
        %s143 = smul.addr %s142, 8
        %s144 = scalar_lea.vmem %s1, %s143
        %p145 = pneg %p63
        %p146 = pneg %p60
        %p147 = pneg %p89
        %p148 = pneg %p86
        %s149 = sand.u32 %s76, 1
        %s150 = scalar_lea.sflag [#allocation3], %s149
        %s151 = sand.u32 %s76, 1
        %s152 = smul.addr %s151, 8
        %s153 = scalar_lea.vmem [#allocation2], %s152
        %s154 = smul.u32 2, %s16
        %p155 = scmp.lt.s32.totalorder %s154, 3
        %s156 = scalar_select %p155, %s154, 3
        %s157 = smul.addr %s156, 8
        %s158 = scalar_lea.vmem %s0, %s157
        %s159 = smul.u32 2, %s16
        %s160 = smul.u32 2, %s16
        %p161 = scmp.lt.s32.totalorder %s160, 3
        %s162 = scalar_select %p161, %s160, 3
        %s163 = smul.addr %s162, 8
        %s164 = scalar_lea.vmem %s1, %s163
        %s165 = smul.u32 2, %s16
        %v166 = vld [vmem:[%s158] sm:$0xff]
        %v167 = vld [vmem:[%s158 + $0x8] sm:$0xff]
        %v168 = vld [vmem:[%s164] sm:$0xff]
        %v169 = vld [vmem:[%s164 + $0x8] sm:$0xff]
        %s170 = smul.u32 %s16, 16
        %v171 = vlaneseq
        %v172 = vshrl.u32 %v171, 7
        %v173 = vadd.s32 %v172, 8
        %v174 = vstv %s170
        %v175 = vadd.s32 %v174, %v172
        %v176 = vadd.s32 %v174, %v173
        %vm177 = vcmp.lt.s32.totalorder %v175, 32
        %vm178 = vcmp.lt.s32.totalorder %v176, 32
        %v179 = vsel %vm177, 1, 0
        %v180 = vsel %vm178, 1, 0
        %vm181 = vcmp.eq.s32.totalorder %v179, 1
        %vm182 = vcmp.eq.s32.totalorder %v180, 1
        %v183 = vsel %vm181, %v166, 0.0
        %v184 = vsel %vm182, %v167, 0.0
        %v185 = vlaneseq
        %v186 = vand.u32 %v185, 127
        %187 = vset.pattern.permute.xlu0 0
        %188 = vperm.xlu0 %187, %v168
        %v189 = vpop.permute.xlu0 %188
        %190 = vset.pattern.permute.xlu0 0
        %191 = vperm.xlu0 %190, %v169
        %v192 = vpop.permute.xlu0 %191
        %vm193 = vcmp.eq.s32.totalorder %v186, %v189
        %vm194 = vcmp.eq.s32.totalorder %v186, %v192
        %vm195 = vcmask 80896
        %v196 = vsel %vm195, %v183, -inf
        %197 = vmax.xlane.f32.xlu0 %v196
        %v198 = vpop.xlane.xlu0 %197
        %v199 = vsel %vm195, %v184, -inf
        %200 = vmax.xlane.f32.xlu0 %v199
        %v201 = vpop.xlane.xlu0 %200
        %v202 = vsub.f32 %v183, %v198
        %v203 = vsub.f32 %v184, %v201
        %v204 = vmul.f32 %v202, 1.442695
        %v205 = vpow.pop %v204
        %v206 = vmul.f32 %v203, 1.442695
        %v207 = vpow.pop %v206
        %v208 = vsel %vm195, %v205, 0.0
        %209 = vadd.xlane.f32.xlu0 %v208
        %v210 = vpop.xlane.xlu0 %209
        %v211 = vsel %vm195, %v207, 0.0
        %212 = vadd.xlane.f32.xlu0 %v211
        %v213 = vpop.xlane.xlu0 %212
        %v214 = vlog2.pop %v210
        %v215 = vmul.f32 %v214, 0.6931472
        %v216 = vlog2.pop %v213
        %v217 = vmul.f32 %v216, 0.6931472
        %v218 = vrcp.pop %v210
        %v219 = vmul.f32 1.0, %v218
        %v220 = vrcp.pop %v213
        %v221 = vmul.f32 1.0, %v220
        %v222 = vsel %vm193, %v202, 0.0
        %v223 = vsel %vm194, %v203, 0.0
        %v224 = vsel %vm195, %v222, 0.0
        %225 = vadd.xlane.f32.xlu0 %v224
        %v226 = vpop.xlane.xlu0 %225
        %v227 = vsel %vm195, %v223, 0.0
        %228 = vadd.xlane.f32.xlu0 %v227
        %v229 = vpop.xlane.xlu0 %228
        %v230 = vsub.f32 %v226, %v215
        %v231 = vsub.f32 %v229, %v217
        %v232 = vsel %vm195, %v202, 0.0
        %233 = vadd.xlane.f32.xlu0 %v232
        %v234 = vpop.xlane.xlu0 %233
        %v235 = vsel %vm195, %v203, 0.0
        %236 = vadd.xlane.f32.xlu0 %v235
        %v237 = vpop.xlane.xlu0 %236
        %v238 = vmul.f32 %v215, 10.0
        %v239 = vmul.f32 %v217, 10.0
        %v240 = vsub.f32 %v234, %v238
        %v241 = vsub.f32 %v237, %v239
        %v242 = vrcp.pop %v240
        %v243 = vmul.f32 %v230, %v242
        %v244 = vrcp.pop %v241
        %v245 = vmul.f32 %v231, %v244
        %v246 = vmul.f32 %v205, %v219
        %v247 = vmul.f32 %v207, %v221
        %v248 = vmax.f32 %v246, 1e-07
        %v249 = vmax.f32 %v247, 1e-07
        %v250 = vsel %vm193, 0.0, %v248
        %v251 = vsel %vm194, 0.0, %v249
        %v252 = vsel %vm195, %v250, 0.0
        %253 = vadd.xlane.f32.xlu0 %v252
        %v254 = vpop.xlane.xlu0 %253
        %v255 = vsel %vm195, %v251, 0.0
        %256 = vadd.xlane.f32.xlu0 %v255
        %v257 = vpop.xlane.xlu0 %256
        %v258 = vmul.f32 %v254, 9.2103405
        %v259 = vmul.f32 %v257, 9.2103405
        %v260 = vcvt.s32.f32 %v179
        %v261 = vcvt.s32.f32 %v180
        %v262 = vmul.f32 %v243, %v260
        %v263 = vmul.f32 %v245, %v261
        %vm264 = vcmask 7168
        %v265 = vsel %vm264, %v262, 0.0
        %v266 = vsel %vm264, %v263, 0.0
        %v267 = vadd.f32 %v265, %v266
        %268 = vadd.xlane.f32.xlu0 %v267
        %v269 = vpop.xlane.xlu0 %268
        %v270 = vrot.slane %v269, 4
        %v271 = vadd.f32 %v269, %v270
        %v272 = vrot.slane %v271, 2
        %v273 = vadd.f32 %v271, %v272
        %v274 = vrot.slane %v273, 1
        %v275 = vadd.f32 %v273, %v274
        %s276 = vtos %v275
        %s277 = smul.f32 %s276, 0.03125
        %v278 = vmul.f32 %v258, %v260
        %v279 = vmul.f32 %v259, %v261
        %v280 = vsel %vm264, %v278, 0.0
        %v281 = vsel %vm264, %v279, 0.0
        %v282 = vadd.f32 %v280, %v281
        %283 = vadd.xlane.f32.xlu0 %v282
        %v284 = vpop.xlane.xlu0 %283
        %v285 = vrot.slane %v284, 4
        %v286 = vadd.f32 %v284, %v285
        %v287 = vrot.slane %v286, 2
        %v288 = vadd.f32 %v286, %v287
        %v289 = vrot.slane %v288, 1
        %v290 = vadd.f32 %v288, %v289
        %s291 = vtos %v290
        %s292 = smul.f32 %s291, 0.03125
        %s293 = sadd.f32 %s277, %s292
        %v294 = vstv %s293
        %v295 = vadd.f32 %v294, 0.0
        %296 = vst [vmem:[%s153] sm:$0xff] %v295
        %s297 = sand.u32 %s76, 1
        %s298 = scalar_lea.sflag [#allocation3], %s297
        %s299 = sand.u32 %s76, 1
        %s300 = smul.addr %s299, 8
        %s301 = scalar_lea.vmem [#allocation2], %s300
        // Predicated region
        $region29: #{tpu_custom_call.1} parent=27 // pred_check
          %p302 = pneg %p86
        $region30: #{tpu_custom_call.1} parent=27 // pred_check_branch
          %304 = sbr.rel (%p302) target = $region32
        $region31: #{tpu_custom_call.1} parent=27 // pred_region
          %s306 = ssub.s32 128, 128
          %307 = vsyncadd %s298, %s306
          %s308 = smul.addr %s16, 128
          %s309 = scalar_lea.hbm %s2, %s308
          %s311 = sshll.u32 %s301, 4
          %s312 = int_to_ptr.vmem [resolvable:$true] %s311
          %314 = dma.vmem_to_hbm [thread:$0]  %s312, 128, %s309, %s298
        $region32: #{tpu_custom_call.1} parent=27 // pred_fallthru
          _
      $region28: #{tpu_custom_call.1} parent=5 // pred_fallthru
        _
      %p315 = scmp.le.s32.totalorder 2, %s11
      // Predicated region
      $region33: #{tpu_custom_call.1} parent=5 // pred_check
        %p316 = pneg %p315
      $region34: #{tpu_custom_call.1} parent=5 // pred_check_branch
        %318 = sbr.rel (%p316) target = $region36
      $region35: #{tpu_custom_call.1} parent=5 // pred_region
        %s319 = ssub.s32 %s11, 2
        // Predicated region
        $region37: #{tpu_custom_call.1} parent=35 // pred_check
          %p320 = pneg %p92
        $region38: #{tpu_custom_call.1} parent=35 // pred_check_branch
          %322 = sbr.rel (%p320) target = $region40
        $region39: #{tpu_custom_call.1} parent=35 // pred_region
          %s323 = sand.u32 %s77, 1
          %s324 = scalar_lea.sflag [#allocation3], %s323
          %s325 = sand.u32 %s77, 1
          %s326 = smul.addr %s325, 8
          %s327 = scalar_lea.vmem [#allocation2], %s326
          %328 = dma.done %s324, 128
        $region40: #{tpu_custom_call.1} parent=35 // pred_fallthru
          _
      $region36: #{tpu_custom_call.1} parent=5 // pred_fallthru
        _
    $region6: #{tpu_custom_call.1} parent=1 // loop_footer
      %s15 = sadd.s32 1, %s11
    $region7: #{tpu_custom_call.1} parent=1 // loop_footer_branch
      %10 = sbr.rel target = $region3
    $region8: #{tpu_custom_call.1} parent=1 // loop_exit
      _
    %329 = vsyncpa [#allocation3], 1
    %s330 = scalar_lea.sflag [#allocation3], 1
    %331 = vsyncpa %s330, 1

</llo_original>
